<compile_context>
chip_gen: v7x
topology: tpu7x:2x2x1
jax: 0.10.0
libtpu: 0.0.40
codegen_flags: <defaults>
</compile_context>

<pallas_src>
import functools

import jax
import jax.numpy as jnp
from jax.experimental import pallas as pl
from jax.experimental.pallas import tpu as pltpu

# --- Args() config mirrored ---
HIDDEN = 8
CONCAT = 4
ELU_ALPHA = 0.2      # F.elu(..., alpha=args.alpha)
DROPOUT_P = 0.5      # forward evaluated in eval mode -> dropout is identity


# ---------------------------------------------------------------------------
# Kernels
# ---------------------------------------------------------------------------
def node_linear_kernel(x_ref, w_ref, b_ref, y_ref, s_ref):
    """Per-node transform, one MXU dispatch for both SAGE linear maps.

    x_ref : [TR, FINP]      node features (lane-dense, zero padded)
    w_ref : [FINP, 2*FP]    [ W_lin_l | W_lin_r ]  (pre-stacked, zero padded)
    b_ref : [1, FP]         lin_l bias
    y_ref : [TR, FP] bf16   x @ W_lin_l            (aggregation RHS)
    s_ref : [TR, FP] f32    x @ W_lin_r + bias     (self / root term)
    """
    fp = y_ref.shape[-1]
    ys = jnp.dot(x_ref[...], w_ref[...], preferred_element_type=jnp.float32)
    y_ref[...] = ys[:, :fp].astype(y_ref.dtype)
    s_ref[...] = (ys[:, fp:] + b_ref[...]).astype(s_ref.dtype)


def aggregate_kernel(a_ref, y_ref, s_ref, o_ref, acc_ref, *, apply_elu, alpha):
    """Tiled  out = A @ Y + S  (+ optional ELU), K-reduction on grid axis 1.

    a_ref : [TM, TK] bf16   row-normalized adjacency tile
    y_ref : [TK, FP] bf16   pre-multiplied features (rows = K tile)
    s_ref : [TM, FP] f32    self term (rows = output tile)
    o_ref : [TM, FP] f32
    acc   : [TM, FP] f32    VMEM accumulator, resident across K
    """
    k = pl.program_id(1)

    @pl.when(k == 0)
    def _():
        acc_ref[...] = jnp.zeros_like(acc_ref)

    acc_ref[...] += jnp.dot(a_ref[...], y_ref[...],
                            preferred_element_type=jnp.float32)

    @pl.when(k == pl.num_programs(1) - 1)
    def _():
        h = acc_ref[...] + s_ref[...]
        if apply_elu:
            # jnp.exp lands on the EUP slot; the select is the only VPU cost.
            h = jnp.where(h > 0, h, alpha * (jnp.exp(h) - 1.0))
        o_ref[...] = h.astype(o_ref.dtype)


# ---------------------------------------------------------------------------
# pallas_call wrappers
# ---------------------------------------------------------------------------
def _node_linear(x, w, b, tr, vmem_limit):
    n, finp = x.shape
    fp = b.shape[-1]
    return pl.pallas_call(
        node_linear_kernel,
        out_shape=(jax.ShapeDtypeStruct((n, fp), jnp.bfloat16),
                   jax.ShapeDtypeStruct((n, fp), jnp.float32)),
        grid_spec=pltpu.PrefetchScalarGridSpec(
            num_scalar_prefetch=0, grid=(n // tr,),
            in_specs=[pl.BlockSpec((tr, finp), lambda i: (i, 0)),
                      pl.BlockSpec((finp, 2 * fp), lambda i: (0, 0)),
                      pl.BlockSpec((1, fp), lambda i: (0, 0))],
            out_specs=(pl.BlockSpec((tr, fp), lambda i: (i, 0)),
                       pl.BlockSpec((tr, fp), lambda i: (i, 0)))),
        compiler_params=pltpu.CompilerParams(
            dimension_semantics=("parallel",),
            vmem_limit_bytes=vmem_limit),
    )(x, w, b)


def _aggregate(a, y, s, tm, tk, apply_elu, vmem_limit):
    n = a.shape[0]
    fp = y.shape[-1]
    kern = functools.partial(aggregate_kernel, apply_elu=apply_elu,
                             alpha=ELU_ALPHA)
    return pl.pallas_call(
        kern,
        out_shape=jax.ShapeDtypeStruct((n, fp), jnp.float32),
        grid_spec=pltpu.PrefetchScalarGridSpec(
            num_scalar_prefetch=0, grid=(n // tm, n // tk),
            in_specs=[pl.BlockSpec((tm, tk), lambda i, k: (i, k)),
                      pl.BlockSpec((tk, fp), lambda i, k: (k, 0)),
                      pl.BlockSpec((tm, fp), lambda i, k: (i, 0))],
            out_specs=pl.BlockSpec((tm, fp), lambda i, k: (i, 0)),
            scratch_shapes=[pltpu.VMEM((tm, fp), jnp.float32)]),
        compiler_params=pltpu.CompilerParams(
            dimension_semantics=("parallel", "arbitrary"),
            vmem_limit_bytes=vmem_limit),
    )(a, y, s)


# ---------------------------------------------------------------------------
# Host-side helpers
# ---------------------------------------------------------------------------
def _round_up(x, m):
    return ((x + m - 1) // m) * m


def _block_diag(w):
    """[C, fin, fout] -> block-diagonal [C*fin, C*fout]."""
    c, fin, fout = w.shape
    eye = jnp.eye(c, dtype=w.dtype)
    return jnp.einsum("kio,kl->kilo", w, eye).reshape(c * fin, c * fout)


def _device_tuning():
    """(max A-tile width, vmem_limit_bytes) per TPU generation."""
    kind = ""
    try:
        kind = jax.devices()[0].device_kind.lower()
    except Exception:
        pass
    if "v7" in kind or "tpu7" in kind:
        return 1024, 48 * 1024 * 1024          # 64 MiB physical VMEM
    if "v5" in kind or "v6" in kind:
        return 2048, 96 * 1024 * 1024          # 128 MiB physical VMEM
    return 512, None                           # conservative default


def _pick_tile(n, cap):
    """Largest multiple of 128 that divides n and is <= cap (n % 128 == 0)."""
    t = max(128, (min(n, cap) // 128) * 128)
    while n % t:
        t -= 128
    return t


def build_mean_adjacency(edge_index, num_nodes):
    """A[i, j] = (# edges j->i) / in_degree(i); zero in-degree rows are 0."""
    # TODO(synk): for large, sparse graphs replace this dense O(N^2) operator
    # with a gather/segment-mean Pallas kernel (PrefetchScalarGridSpec).
    src, dst = edge_index[0], edge_index[1]
    a = jnp.zeros((num_nodes, num_nodes), jnp.float32).at[dst, src].add(1.0)
    deg = a.sum(axis=1, keepdims=True)
    return jnp.where(deg > 0, a / jnp.maximum(deg, 1.0), 0.0)


def lasage_forward(x_list, edge_index, params, num_nodes, max_tile=None):
    """Fused LASAGE forward (eval mode: both dropouts are identity)."""
    n = num_nodes
    np_ = _round_up(n, 128)
    nclass = params["wl2"].shape[1]
    hc = HIDDEN * CONCAT
    hcp = _round_up(hc, 128)
    ncp = _round_up(nclass, 128)

    cap, vmem_limit = _device_tuning()
    if max_tile is not None:
        cap = min(cap, max_tile)
    tm = tk = _pick_tile(np_, cap)
    tr = _pick_tile(np_, min(cap, 512))        # row tile for node-linear pass

    # Dense mean-aggregation operator, padded, streamed as bf16 (mem-bound).
    a = build_mean_adjacency(edge_index, n)
    a = jnp.pad(a, ((0, np_ - n), (0, np_ - n))).astype(jnp.bfloat16)

    # Lane-dense packed branch features: [N, CONCAT*nfeat].
    x = jnp.concatenate([xi.astype(jnp.float32) for xi in x_list], axis=-1)
    fin = x.shape[1]
    finp = _round_up(fin, 128)
    x = jnp.pad(x, ((0, np_ - n), (0, finp - fin)))

    # Layer-1 weights: block-diagonal (one matmul covers all branches),
    # lin_l | lin_r horizontally stacked (one MXU dispatch for both).
    wl1 = _block_diag(params["wl1"])
    wr1 = _block_diag(params["wr1"])
    w1 = jnp.concatenate([jnp.pad(wl1, ((0, finp - fin), (0, hcp - hc))),
                          jnp.pad(wr1, ((0, finp - fin), (0, hcp - hc)))],
                         axis=1)
    b1 = jnp.pad(params["bl1"].reshape(1, hc), ((0, 0), (0, hcp - hc)))

    # Layer-2 weights, padded to lane-dense widths.
    w2 = jnp.concatenate([jnp.pad(params["wl2"],
                                  ((0, hcp - hc), (0, ncp - nclass))),
                          jnp.pad(params["wr2"],
                                  ((0, hcp - hc), (0, ncp - nclass)))],
                         axis=1)
    b2 = jnp.pad(params["bl2"], ((0, 0), (0, ncp - nclass)))

    # TODO(synk): F.dropout(p=0.5) before each layer omitted (eval => identity).
    # Layer 1:  h = elu(A @ (x W_l) + x W_r + b)      [reassociated]
    y1, s1 = _node_linear(x, w1, b1, tr, vmem_limit)
    h1 = _aggregate(a, y1, s1, tm, tk, True, vmem_limit)       # [np_, hcp]

    # Layer 2:  out = A @ (h W_l) + h W_r + b
    y2, s2 = _node_linear(h1, w2, b2, tr, vmem_limit)
    out = _aggregate(a, y2, s2, tm, tk, False, vmem_limit)     # [np_, ncp]

    return out[:n, :nclass]


# ---------------------------------------------------------------------------
# Pure-JAX reference (original, un-reassociated formulation, f32)
# ---------------------------------------------------------------------------
def lasage_reference(x_list, edge_index, params, num_nodes):
    a = build_mean_adjacency(edge_index, num_nodes)
    hs = []
    for k in range(CONCAT):
        xk = x_list[k].astype(jnp.float32)
        agg = a @ xk
        h = (agg @ params["wl1"][k] + params["bl1"][k][None, :]
             + xk @ params["wr1"][k])
        hs.append(jnp.where(h > 0, h, ELU_ALPHA * (jnp.exp(h) - 1.0)))
    hcat = jnp.concatenate(hs, axis=-1)
    agg2 = a @ hcat
    return agg2 @ params["wl2"] + params["bl2"] + hcat @ params["wr2"]


def init_params(key, nfeat, nclass):
    """Deterministic synthetic init. Weights stored as [in, out]."""
    ks = jax.random.split(key, 6)
    hid_cat = HIDDEN * CONCAT

    def glorot(k, shape):
        fan_in, fan_out = shape[-2], shape[-1]
        lim = jnp.sqrt(6.0 / (fan_in + fan_out))
        return jax.random.uniform(k, shape, jnp.float32, -lim, lim)

    return {
        "wl1": glorot(ks[0], (CONCAT, nfeat, HIDDEN)),
        "bl1": 0.01 * jax.random.normal(ks[1], (CONCAT, HIDDEN), jnp.float32),
        "wr1": glorot(ks[2], (CONCAT, nfeat, HIDDEN)),
        "wl2": glorot(ks[3], (hid_cat, nclass)),
        "bl2": 0.01 * jax.random.normal(ks[4], (1, nclass), jnp.float32),
        "wr2": glorot(ks[5], (hid_cat, nclass)),
    }


if __name__ == "__main__":
    N, NFEAT, NCLASS = 512, 32, 4

    key = jax.random.PRNGKey(0)
    k_param, k_x, k_e1, k_e2 = jax.random.split(key, 4)
    params = init_params(k_param, NFEAT, NCLASS)

    # per-branch node features: list of [N, nfeat]
    x_keys = jax.random.split(k_x, CONCAT)
    x_list = [jax.random.normal(k, (N, NFEAT), jnp.float32) for k in x_keys]

    # deterministic graph: bidirectional ring + random chords
    src_ring = jnp.arange(N, dtype=jnp.int32)
    dst_ring = (src_ring + 1) % N
    extra_src = jax.random.randint(k_e1, (4 * N,), 0, N, dtype=jnp.int32)
    extra_dst = jax.random.randint(k_e2, (4 * N,), 0, N, dtype=jnp.int32)
    src = jnp.concatenate([src_ring, dst_ring, extra_src])
    dst = jnp.concatenate([dst_ring, src_ring, extra_dst])
    edge_index = jnp.stack([src, dst], axis=0)             # [2, E]

    # max_tile=128 forces a 4x4 aggregation grid at this small N so the
    # pipelined K-accumulation path is exercised; real sizes use device caps.
    out = lasage_forward(x_list, edge_index, params, N, max_tile=128)
    jax.block_until_ready(out)

    ref = lasage_reference(x_list, edge_index, params, N)
    err = float(jnp.max(jnp.abs(out - ref)))
    scale = float(jnp.max(jnp.abs(ref))) + 1.0
    assert out.shape == (N, NCLASS) and out.dtype == jnp.float32
    assert err < 5e-2 * scale, f"max abs err {err} (scale {scale})"
    print("KERNEL_OK")
</pallas_src>

<mosaic_0001>
module attributes {stable_mosaic.version = 11 : i64} {
  func.func @node_linear_kernel(%arg0: i32, %arg1: memref<128x128xf32, #tpu.memory_space<vmem>>, %arg2: memref<128x256xf32, #tpu.memory_space<vmem>>, %arg3: memref<1x128xf32, #tpu.memory_space<vmem>>, %arg4: memref<128x128xbf16, #tpu.memory_space<vmem>>, %arg5: memref<128x128xf32, #tpu.memory_space<vmem>>) attributes {dimension_semantics = [#tpu.dimension_semantics<parallel>], iteration_bounds = array<i64: 4>, scalar_prefetch = 0 : i64, scratch_operands = 0 : i64, tpu.core_type = #tpu.core_type<tc>, window_params = [{transform_indices = @transform_0, window_bounds = array<i64: 128, 128>}, {pipeline_mode = #tpu.pipeline_mode<synchronous>, transform_indices = @transform_1, window_bounds = array<i64: 128, 256>}, {pipeline_mode = #tpu.pipeline_mode<synchronous>, transform_indices = @transform_2, window_bounds = array<i64: 1, 128>}, {transform_indices = @transform_3, window_bounds = array<i64: 128, 128>}, {transform_indices = @transform_4, window_bounds = array<i64: 128, 128>}]} {
    %c0 = arith.constant 0 : index
    %c0_0 = arith.constant 0 : index
    %0 = vector.load %arg1[%c0, %c0_0] : memref<128x128xf32, #tpu.memory_space<vmem>>, vector<128x128xf32>
    %c0_1 = arith.constant 0 : index
    %c0_2 = arith.constant 0 : index
    %1 = vector.load %arg2[%c0_1, %c0_2] : memref<128x256xf32, #tpu.memory_space<vmem>>, vector<128x256xf32>
    %cst = arith.constant dense<0.000000e+00> : vector<128x256xf32>
    %2 = tpu.matmul %0, %1, %cst {dimension_numbers = #tpu.dot_dimension_numbers<[1], [0], [0], [1], [0, 0, 1, 1], [], []>} : vector<128x128xf32>, vector<128x256xf32>, vector<128x256xf32> -> vector<128x256xf32>
    %3 = vector.extract_strided_slice %2 {offsets = [0, 0], sizes = [128, 128], strides = [1, 1]} : vector<128x256xf32> to vector<128x128xf32>
    %4 = arith.truncf %3 : vector<128x128xf32> to vector<128x128xbf16>
    %c0_3 = arith.constant 0 : index
    %c0_4 = arith.constant 0 : index
    %5 = vector.load %arg4[%c0_3, %c0_4] : memref<128x128xbf16, #tpu.memory_space<vmem>>, vector<128x128xbf16>
    tpu.vector_store %arg4[%c0_3, %c0_4], %4 {strides = array<i32>} : memref<128x128xbf16, #tpu.memory_space<vmem>>, vector<128x128xbf16>,
    %6 = vector.extract_strided_slice %2 {offsets = [0, 128], sizes = [128, 128], strides = [1, 1]} : vector<128x256xf32> to vector<128x128xf32>
    %c0_5 = arith.constant 0 : index
    %c0_6 = arith.constant 0 : index
    %7 = vector.load %arg3[%c0_5, %c0_6] : memref<1x128xf32, #tpu.memory_space<vmem>>, vector<1x128xf32>
    %8 = vector.broadcast %7 : vector<1x128xf32> to vector<128x128xf32>
    %9 = arith.addf %6, %8 : vector<128x128xf32>
    %c0_7 = arith.constant 0 : index
    %c0_8 = arith.constant 0 : index
    %10 = vector.load %arg5[%c0_7, %c0_8] : memref<128x128xf32, #tpu.memory_space<vmem>>, vector<128x128xf32>
    tpu.vector_store %arg5[%c0_7, %c0_8], %9 {strides = array<i32>} : memref<128x128xf32, #tpu.memory_space<vmem>>, vector<128x128xf32>,
    return
  }
  func.func @transform_0(%arg0: i32) -> (i32, i32) {
    %c0_i32 = arith.constant 0 : i32
    %c0_i32_0 = arith.constant 0 : i32
    return %arg0, %c0_i32 : i32, i32
  }
  func.func @transform_1(%arg0: i32) -> (i32, i32) {
    %c0_i32 = arith.constant 0 : i32
    %c0_i32_0 = arith.constant 0 : i32
    %c0_i32_1 = arith.constant 0 : i32
    return %c0_i32, %c0_i32_0 : i32, i32
  }
  func.func @transform_2(%arg0: i32) -> (i32, i32) {
    %c0_i32 = arith.constant 0 : i32
    %c0_i32_0 = arith.constant 0 : i32
    %c0_i32_1 = arith.constant 0 : i32
    return %c0_i32, %c0_i32_0 : i32, i32
  }
  func.func @transform_3(%arg0: i32) -> (i32, i32) {
    %c0_i32 = arith.constant 0 : i32
    %c0_i32_0 = arith.constant 0 : i32
    return %arg0, %c0_i32 : i32, i32
  }
  func.func @transform_4(%arg0: i32) -> (i32, i32) {
    %c0_i32 = arith.constant 0 : i32
    %c0_i32_0 = arith.constant 0 : i32
    return %arg0, %c0_i32 : i32, i32
  }
}

</mosaic_0001>

<llo_original>
// kernel: tpu_custom_call.1
$region0: #{tpu_custom_call.1}
  #allocation0 [shape = 'u32[]', space=smem, size = 0x4, offset = 0x4, fixed_abs, tag = 'smem constant byte address 0x4 - core index']
  #allocation1 [shape = 'u32[144,128]{1,0:T(1,128)}', space=vmem, size = 0x12000, scoped, tag = 'internal scratch']
  %s0 = inlined_call_operand.hbm [shape: f32[512,128], index: 0, kind: input, shape index: {}]
  %s1 = inlined_call_operand.hbm [shape: f32[128,256], index: 1, kind: input, shape index: {}]
  %s2 = inlined_call_operand.vmem [shape: f32[1,128], index: 2, kind: input, shape index: {}]
  %s3 = inlined_call_operand.hbm [shape: bf16[512,128], index: 3, kind: output, shape index: {0}]
  %s4 = inlined_call_operand.hbm [shape: f32[512,128], index: 4, kind: output, shape index: {1}]
  %5 = xla_tuple %s3, %s4
  %s6 = sld [smem:[#allocation0]]
  $region61: #{tpu_custom_call.1} parent=0
    _
  %s8 = ssub.s32 1, %s6
  %s9 = scalar_select 0, %s8, %s6
  $region1: #{tpu_custom_call.1} parent=0
    #allocation2 [shape = 'u8[131072]{0}', space=vmem, size = 0x20000, scoped, tag = 'input window, operand 0']
    #allocation3 [shape = 's32[2]{0}', space=sflag, size = 0x8, scoped, tag = 'scoped memory for tpu_custom_call.1']
    #allocation4 [shape = 's32[2]{0}', space=sflag, size = 0x8, scoped, tag = 'scoped memory for tpu_custom_call.1']
    #allocation5 [shape = 'u8[131072]{0}', space=vmem, size = 0x20000, scoped, tag = 'input window, operand 1, single buffered']
    #allocation6 [shape = 's32[1]{0}', space=sflag, size = 0x4, scoped, tag = 'scoped memory for tpu_custom_call.1']
    #allocation7 [shape = 'u8[65536]{0}', space=vmem, size = 0x10000, scoped, tag = 'output window, operand 0']
    #allocation8 [shape = 'u8[131072]{0}', space=vmem, size = 0x20000, scoped, tag = 'output window, operand 1']
    #allocation9 [shape = 's32[2]{0}', space=sflag, size = 0x8, scoped, tag = 'scoped memory for tpu_custom_call.1']
    %10 = vsyncpa [#allocation3], 0
    %s11 = scalar_lea.sflag [#allocation3], 1
    %12 = vsyncpa %s11, 0
    %13 = vsyncpa [#allocation6], 0
    %14 = vsyncpa [#allocation4], 0
    %s15 = scalar_lea.sflag [#allocation4], 1
    %16 = vsyncpa %s15, 0
    %17 = vsyncpa [#allocation9], 0
    %s18 = scalar_lea.sflag [#allocation9], 1
    %19 = vsyncpa %s18, 0
    loop: start=0, step=1, limit=6
    $region2: #{tpu_custom_call.1} parent=1 // loop_pre_header
      _
    $region3: #{tpu_custom_call.1} parent=1 // loop_header
      %s21 = sphi 0, %s25
      %p22 = scmp.ge.s32.totalorder %s21, 6
      %s31 = sphi 0, %s33
      %s34 = sphi 0, %s31
      %s35 = sphi 0, %s34
      %s51 = sphi 0, %s35
      %s55 = sphi 0, %s55
      %s57 = sphi 0, %s55
      %s58 = sphi 0, %s57
      %s72 = sphi 0, %s58
      %s76 = sphi 0, %s76
      %s78 = sphi 0, %s76
      %s79 = sphi 0, %s78
      %s93 = sphi 0, %s79
      %s99 = sphi 0, %s101
      %s102 = sphi 0, %s99
      %s103 = sphi 0, %s102
      %s119 = sphi 0, %s103
      %s125 = sphi 0, %s127
      %s128 = sphi 0, %s125
      %s129 = sphi 0, %s128
      %s145 = sphi 0, %s129
    $region4: #{tpu_custom_call.1} parent=1 // loop_header_branch
      %24 = sbr.rel (%p22) target = $region8
    $region5: #{tpu_custom_call.1} parent=1 // loop_body
      %s26 = ssub.s32 %s21, 1
      %s27 = ssub.s32 %s21, 2
      %s28 = sadd.s32 %s21, 1
      %s29 = ssub.s32 %s21, %s28
      %p30 = scmp.eq.s32.totalorder %s29, 0
      %s32 = sadd.s32 %s31, 1
      %s33 = scalar_select %p30, %s31, %s32
      %p36 = pneg %p30
      %p37 = scmp.eq.s32.totalorder %s21, 3
      %p38 = por %p36, %p37
      %p39 = scmp.ne.s32.totalorder %s31, %s34
      %p40 = scmp.eq.s32.totalorder %s21, 0
      %p41 = por %p39, %p40
      %p42 = scmp.ne.s32.totalorder %s31, %s34
      %p43 = scmp.eq.s32.totalorder %s26, 3
      %p44 = por %p42, %p43
      %p45 = scmp.ne.s32.totalorder %s34, %s35
      %p46 = scmp.eq.s32.totalorder %s26, 0
      %p47 = por %p45, %p46
      %p48 = scmp.ne.s32.totalorder %s34, %s35
      %p49 = scmp.eq.s32.totalorder %s27, 3
      %p50 = por %p48, %p49
      %p52 = scmp.ne.s32.totalorder %s35, %s51
      %p53 = scmp.eq.s32.totalorder %s27, 0
      %p54 = por %p52, %p53
      %s56 = sadd.s32 %s55, 1
      %p59 = scmp.eq.s32.totalorder %s21, 3
      %p60 = scmp.ne.s32.totalorder %s55, %s57
      %p61 = scmp.eq.s32.totalorder %s21, 0
      %p62 = por %p60, %p61
      %p63 = scmp.ne.s32.totalorder %s55, %s57
      %p64 = scmp.eq.s32.totalorder %s26, 3
      %p65 = por %p63, %p64
      %p66 = scmp.ne.s32.totalorder %s57, %s58
      %p67 = scmp.eq.s32.totalorder %s26, 0
      %p68 = por %p66, %p67
      %p69 = scmp.ne.s32.totalorder %s57, %s58
      %p70 = scmp.eq.s32.totalorder %s27, 3
      %p71 = por %p69, %p70
      %p73 = scmp.ne.s32.totalorder %s58, %s72
      %p74 = scmp.eq.s32.totalorder %s27, 0
      %p75 = por %p73, %p74
      %s77 = sadd.s32 %s76, 1
      %p80 = scmp.eq.s32.totalorder %s21, 3
      %p81 = scmp.ne.s32.totalorder %s76, %s78
      %p82 = scmp.eq.s32.totalorder %s21, 0
      %p83 = por %p81, %p82
      %p84 = scmp.ne.s32.totalorder %s76, %s78
      %p85 = scmp.eq.s32.totalorder %s26, 3
      %p86 = por %p84, %p85
      %p87 = scmp.ne.s32.totalorder %s78, %s79
      %p88 = scmp.eq.s32.totalorder %s26, 0
      %p89 = por %p87, %p88
      %p90 = scmp.ne.s32.totalorder %s78, %s79
      %p91 = scmp.eq.s32.totalorder %s27, 3
      %p92 = por %p90, %p91
      %p94 = scmp.ne.s32.totalorder %s79, %s93
      %p95 = scmp.eq.s32.totalorder %s27, 0
      %p96 = por %p94, %p95
      %s97 = ssub.s32 %s21, %s28
      %p98 = scmp.eq.s32.totalorder %s97, 0
      %s100 = sadd.s32 %s99, 1
      %s101 = scalar_select %p98, %s99, %s100
      %p104 = pneg %p98
      %p105 = scmp.eq.s32.totalorder %s21, 3
      %p106 = por %p104, %p105
      %p107 = scmp.ne.s32.totalorder %s99, %s102
      %p108 = scmp.eq.s32.totalorder %s21, 0
      %p109 = por %p107, %p108
      %p110 = scmp.ne.s32.totalorder %s99, %s102
      %p111 = scmp.eq.s32.totalorder %s26, 3
      %p112 = por %p110, %p111
      %p113 = scmp.ne.s32.totalorder %s102, %s103
      %p114 = scmp.eq.s32.totalorder %s26, 0
      %p115 = por %p113, %p114
      %p116 = scmp.ne.s32.totalorder %s102, %s103
      %p117 = scmp.eq.s32.totalorder %s27, 3
      %p118 = por %p116, %p117
      %p120 = scmp.ne.s32.totalorder %s103, %s119
      %p121 = scmp.eq.s32.totalorder %s27, 0
      %p122 = por %p120, %p121
      %s123 = ssub.s32 %s21, %s28
      %p124 = scmp.eq.s32.totalorder %s123, 0
      %s126 = sadd.s32 %s125, 1
      %s127 = scalar_select %p124, %s125, %s126
      %p130 = pneg %p124
      %p131 = scmp.eq.s32.totalorder %s21, 3
      %p132 = por %p130, %p131
      %p133 = scmp.ne.s32.totalorder %s125, %s128
      %p134 = scmp.eq.s32.totalorder %s21, 0
      %p135 = por %p133, %p134
      %p136 = scmp.ne.s32.totalorder %s125, %s128
      %p137 = scmp.eq.s32.totalorder %s26, 3
      %p138 = por %p136, %p137
      %p139 = scmp.ne.s32.totalorder %s128, %s129
      %p140 = scmp.eq.s32.totalorder %s26, 0
      %p141 = por %p139, %p140
      %p142 = scmp.ne.s32.totalorder %s128, %s129
      %p143 = scmp.eq.s32.totalorder %s27, 3
      %p144 = por %p142, %p143
      %p146 = scmp.ne.s32.totalorder %s129, %s145
      %p147 = scmp.eq.s32.totalorder %s27, 0
      %p148 = por %p146, %p147
      %p149 = scmp.le.s32.totalorder 1, %s21
      %p150 = scmp.lt.s32.totalorder %s21, 5
      %p151 = pnand %p149, %p150
      %p152 = pneg %p151
      // Predicated region
      $region9: #{tpu_custom_call.1} parent=5 // pred_check
        _
      $region10: #{tpu_custom_call.1} parent=5 // pred_check_branch
        %154 = sbr.rel (%p151) target = $region12
      $region11: #{tpu_custom_call.1} parent=5 // pred_region
        %s155 = ssub.s32 %s21, 1
        // Predicated region
        $region13: #{tpu_custom_call.1} parent=11 // pred_check
          %p156 = pneg %p68
        $region14: #{tpu_custom_call.1} parent=11 // pred_check_branch
          %158 = sbr.rel (%p156) target = $region16
        $region15: #{tpu_custom_call.1} parent=11 // pred_region
          %s160 = ssub.s32 4096, 4096
          %161 = vsyncadd [#allocation6], %s160
          %s162 = sshll.u32 [#allocation5], 4
          %s163 = int_to_ptr.vmem [resolvable:$true] %s162
          %168 = dma.hbm_to_vmem [thread:$0]  %s1, 4096, %s163, [#allocation6], 256, 256, 16
        $region16: #{tpu_custom_call.1} parent=11 // pred_fallthru
          _
        // Predicated region
        $region17: #{tpu_custom_call.1} parent=11 // pred_check
          %p169 = pneg %p89
        $region18: #{tpu_custom_call.1} parent=11 // pred_check_branch
          %171 = sbr.rel (%p169) target = $region20
        $region19: #{tpu_custom_call.1} parent=11 // pred_region
          _
        $region20: #{tpu_custom_call.1} parent=11 // pred_fallthru
          _
      $region12: #{tpu_custom_call.1} parent=5 // pred_fallthru
        _
      %p172 = scmp.lt.s32.totalorder %s21, 4
      // Predicated region
      $region21: #{tpu_custom_call.1} parent=5 // pred_check
        %p173 = pneg %p172
      $region22: #{tpu_custom_call.1} parent=5 // pred_check_branch
        %175 = sbr.rel (%p173) target = $region24
      $region23: #{tpu_custom_call.1} parent=5 // pred_region
        // Predicated region
        $region25: #{tpu_custom_call.1} parent=23 // pred_check
          %p176 = pneg %p41
        $region26: #{tpu_custom_call.1} parent=23 // pred_check_branch
          %178 = sbr.rel (%p176) target = $region28
        $region27: #{tpu_custom_call.1} parent=23 // pred_region
          %s179 = sand.u32 %s31, 1
          %s180 = scalar_lea.sflag [#allocation3], %s179
          %s181 = sand.u32 %s31, 1
          %s182 = smul.addr %s181, 128
          %s183 = scalar_lea.vmem [#allocation2], %s182
          %s184 = smul.u32 16, %s21
          %s186 = ssub.s32 2048, 2048
          %187 = vsyncadd %s180, %s186
          %s188 = smul.addr %s184, 128
          %s189 = scalar_lea.hbm %s0, %s188
          %s190 = sshll.u32 %s183, 4
          %s191 = int_to_ptr.vmem [resolvable:$true] %s190
          %196 = dma.hbm_to_vmem [thread:$0]  %s189, 2048, %s191, %s180, 128, 128, 8
        $region28: #{tpu_custom_call.1} parent=23 // pred_fallthru
          _
      $region24: #{tpu_custom_call.1} parent=5 // pred_fallthru
        _
      %p197 = scmp.le.s32.totalorder 1, %s21
      %p198 = scmp.lt.s32.totalorder %s21, 5
      %p199 = pnand %p197, %p198
      %p200 = pneg %p199
      // Predicated region
      $region29: #{tpu_custom_call.1} parent=5 // pred_check
        _
      $region30: #{tpu_custom_call.1} parent=5 // pred_check_branch
        %202 = sbr.rel (%p199) target = $region32
      $region31: #{tpu_custom_call.1} parent=5 // pred_region
        %s203 = ssub.s32 %s21, 1
        %s204 = sand.u32 %s34, 1
        %s205 = scalar_lea.sflag [#allocation3], %s204
        %s206 = sand.u32 %s34, 1
        %s207 = smul.addr %s206, 128
        %s208 = scalar_lea.vmem [#allocation2], %s207
        // Predicated region
        $region33: #{tpu_custom_call.1} parent=31 // pred_check
          %p209 = pneg %p47
        $region34: #{tpu_custom_call.1} parent=31 // pred_check_branch
          %211 = sbr.rel (%p209) target = $region36
        $region35: #{tpu_custom_call.1} parent=31 // pred_region
          %212 = dma.done %s205, 2048
        $region36: #{tpu_custom_call.1} parent=31 // pred_fallthru
          _
        // Predicated region
        $region37: #{tpu_custom_call.1} parent=31 // pred_check
          %p213 = pneg %p68
        $region38: #{tpu_custom_call.1} parent=31 // pred_check_branch
          %215 = sbr.rel (%p213) target = $region40
        $region39: #{tpu_custom_call.1} parent=31 // pred_region
          %216 = dma.done [#allocation6], 4096
        $region40: #{tpu_custom_call.1} parent=31 // pred_fallthru
          _
        %s217 = sand.u32 %s34, 1
        %s218 = scalar_lea.sflag [#allocation3], %s217
        %s219 = sand.u32 %s34, 1
        %s220 = smul.addr %s219, 128
        %s221 = scalar_lea.vmem [#allocation2], %s220
        %p222 = pneg %p47
        %p223 = pneg %p44
        %p224 = pneg %p68
        %p225 = pneg %p65
        %p226 = pneg %p89
        %p227 = pneg %p86
        %p228 = pneg %p115
        %p229 = pneg %p112
        %s230 = sand.u32 %s102, 1
        %s231 = scalar_lea.sflag [#allocation4], %s230
        %s232 = sand.u32 %s102, 1
        %s233 = smul.addr %s232, 64
        %s234 = scalar_lea.vmem [#allocation7], %s233
        %p235 = pneg %p141
        %p236 = pneg %p138
        %s237 = sand.u32 %s128, 1
        %s238 = scalar_lea.sflag [#allocation9], %s237
        %s239 = sand.u32 %s128, 1
        %s240 = smul.addr %s239, 128
        %s241 = scalar_lea.vmem [#allocation8], %s240
        %s242 = smul.u32 16, %s26
        %s243 = smul.u32 16, %s26
        %s244 = smul.u32 16, %s26
        %v245 = vld [vmem:[%s208] sm:$0xff]
        %v246 = vld [vmem:[%s208 + $0x8] sm:$0xff]
        %v247 = vld [vmem:[%s208 + $0x10] sm:$0xff]
        %v248 = vld [vmem:[%s208 + $0x18] sm:$0xff]
        %v249 = vld [vmem:[%s208 + $0x20] sm:$0xff]
        %v250 = vld [vmem:[%s208 + $0x28] sm:$0xff]
        %v251 = vld [vmem:[%s208 + $0x30] sm:$0xff]
        %v252 = vld [vmem:[%s208 + $0x38] sm:$0xff]
        %v253 = vld [vmem:[%s208 + $0x40] sm:$0xff]
        %v254 = vld [vmem:[%s208 + $0x48] sm:$0xff]
        %v255 = vld [vmem:[%s208 + $0x50] sm:$0xff]
        %v256 = vld [vmem:[%s208 + $0x58] sm:$0xff]
        %v257 = vld [vmem:[%s208 + $0x60] sm:$0xff]
        %v258 = vld [vmem:[%s208 + $0x68] sm:$0xff]
        %v259 = vld [vmem:[%s208 + $0x70] sm:$0xff]
        %v260 = vld [vmem:[%s208 + $0x78] sm:$0xff]
        %v261 = vld [vmem:[#allocation5] sm:$0xff]
        %v262 = vld [vmem:[#allocation5 + $0x8] sm:$0xff]
        %v263 = vld [vmem:[#allocation5 + $0x10] sm:$0xff]
        %v264 = vld [vmem:[#allocation5 + $0x18] sm:$0xff]
        %v265 = vld [vmem:[#allocation5 + $0x20] sm:$0xff]
        %v266 = vld [vmem:[#allocation5 + $0x28] sm:$0xff]
        %v267 = vld [vmem:[#allocation5 + $0x30] sm:$0xff]
        %v268 = vld [vmem:[#allocation5 + $0x38] sm:$0xff]
        %v269 = vld [vmem:[#allocation5 + $0x40] sm:$0xff]
        %v270 = vld [vmem:[#allocation5 + $0x48] sm:$0xff]
        %v271 = vld [vmem:[#allocation5 + $0x50] sm:$0xff]
        %v272 = vld [vmem:[#allocation5 + $0x58] sm:$0xff]
        %v273 = vld [vmem:[#allocation5 + $0x60] sm:$0xff]
        %v274 = vld [vmem:[#allocation5 + $0x68] sm:$0xff]
        %v275 = vld [vmem:[#allocation5 + $0x70] sm:$0xff]
        %v276 = vld [vmem:[#allocation5 + $0x78] sm:$0xff]
        %v277 = vld [vmem:[#allocation5 + $0x80] sm:$0xff]
        %v278 = vld [vmem:[#allocation5 + $0x88] sm:$0xff]
        %v279 = vld [vmem:[#allocation5 + $0x90] sm:$0xff]
        %v280 = vld [vmem:[#allocation5 + $0x98] sm:$0xff]
        %v281 = vld [vmem:[#allocation5 + $0xa0] sm:$0xff]
        %v282 = vld [vmem:[#allocation5 + $0xa8] sm:$0xff]
        %v283 = vld [vmem:[#allocation5 + $0xb0] sm:$0xff]
        %v284 = vld [vmem:[#allocation5 + $0xb8] sm:$0xff]
        %v285 = vld [vmem:[#allocation5 + $0xc0] sm:$0xff]
        %v286 = vld [vmem:[#allocation5 + $0xc8] sm:$0xff]
        %v287 = vld [vmem:[#allocation5 + $0xd0] sm:$0xff]
        %v288 = vld [vmem:[#allocation5 + $0xd8] sm:$0xff]
        %v289 = vld [vmem:[#allocation5 + $0xe0] sm:$0xff]
        %v290 = vld [vmem:[#allocation5 + $0xe8] sm:$0xff]
        %v291 = vld [vmem:[#allocation5 + $0xf0] sm:$0xff]
        %v292 = vld [vmem:[#allocation5 + $0xf8] sm:$0xff]
        %293 = vmatprep.subr.mxu0 %v262
        %294 = vmatpush1.msra.mxu0 %v261
        %295 = vmatprep.subr.mxu0 %v264
        %296 = vmatpush1.msra.mxu0 %v263
        %297 = vmatprep.subr.mxu0 %v266
        %298 = vmatpush1.msra.mxu0 %v265
        %299 = vmatprep.subr.mxu0 %v268
        %300 = vmatpush1.msra.mxu0 %v267
        %301 = vmatprep.subr.mxu0 %v270
        %302 = vmatpush1.msra.mxu0 %v269
        %303 = vmatprep.subr.mxu0 %v272
        %304 = vmatpush1.msra.mxu0 %v271
        %305 = vmatprep.subr.mxu0 %v274
        %306 = vmatpush1.msra.mxu0 %v273
        %307 = vmatprep.subr.mxu0 %v276
        %308 = vmatpush1.msra.mxu0 %v275
        %309 = vmatprep.subr.mxu0 %v278
        %310 = vmatpush1.msra.mxu0 %v277
        %311 = vmatprep.subr.mxu0 %v280
        %312 = vmatpush1.msra.mxu0 %v279
        %313 = vmatprep.subr.mxu0 %v282
        %314 = vmatpush1.msra.mxu0 %v281
        %315 = vmatprep.subr.mxu0 %v284
        %316 = vmatpush1.msra.mxu0 %v283
        %317 = vmatprep.subr.mxu0 %v286
        %318 = vmatpush1.msra.mxu0 %v285
        %319 = vmatprep.subr.mxu0 %v288
        %320 = vmatpush1.msra.mxu0 %v287
        %321 = vmatprep.subr.mxu0 %v290
        %322 = vmatpush1.msra.mxu0 %v289
        %323 = vmatprep.subr.mxu0 %v292
        %324 = vmatpush1.msra.mxu0 %v291
        %325 = vmatprep.subr.mxu0 0.0
        %326 = vmatpush1.msra.mxu0 0.0
        %327 = vmatprep.subr.mxu0 0.0
        %328 = vmatpush1.msra.mxu0 0.0
        %329 = vmatprep.subr.mxu0 0.0
        %330 = vmatpush1.msra.mxu0 0.0
        %331 = vmatprep.subr.mxu0 0.0
        %332 = vmatpush1.msra.mxu0 0.0
        %333 = vmatprep.subr.mxu0 0.0
        %334 = vmatpush1.msra.mxu0 0.0
        %335 = vmatprep.subr.mxu0 0.0
        %336 = vmatpush1.msra.mxu0 0.0
        %337 = vmatprep.subr.mxu0 0.0
        %338 = vmatpush1.msra.mxu0 0.0
        %339 = vmatprep.subr.mxu0 0.0
        %340 = vmatpush1.msra.mxu0 0.0
        %341 = vmatprep.subr.mxu0 0.0
        %342 = vmatpush1.msra.mxu0 0.0
        %343 = vmatprep.subr.mxu0 0.0
        %344 = vmatpush1.msra.mxu0 0.0
        %345 = vmatprep.subr.mxu0 0.0
        %346 = vmatpush1.msra.mxu0 0.0
        %347 = vmatprep.subr.mxu0 0.0
        %348 = vmatpush1.msra.mxu0 0.0
        %349 = vmatprep.subr.mxu0 0.0
        %350 = vmatpush1.msra.mxu0 0.0
        %351 = vmatprep.subr.mxu0 0.0
        %352 = vmatpush1.msra.mxu0 0.0
        %353 = vmatprep.subr.mxu0 0.0
        %354 = vmatpush1.msra.mxu0 0.0
        %355 = vmatprep.subr.mxu0 0.0
        %356 = vmatpush1.msra.mxu0 0.0
        %357 = vmatprep.mubr.f32.mxu0 0.0
        %358 = vmatmul.mubr.f32.gmra.mrb[0].mxu0 %v245
        %v359 = vpop.f32.mrb[0].mxu0
        %v360 = vadd.f32 0.0, %v359
        %v361 = vpop.f32.mrb[0].mxu0
        %v362 = vadd.f32 0.0, %v361
        %363 = vmatprep.mubr.f32.mxu0 0.0
        %364 = vmatmul.mubr.f32.gmra.mrb[0].mxu0 %v246
        %v365 = vpop.f32.mrb[0].mxu0
        %v366 = vadd.f32 0.0, %v365
        %v367 = vpop.f32.mrb[0].mxu0
        %v368 = vadd.f32 0.0, %v367
        %369 = vmatprep.mubr.f32.mxu0 0.0
        %370 = vmatmul.mubr.f32.gmra.mrb[0].mxu0 %v247
        %v371 = vpop.f32.mrb[0].mxu0
        %v372 = vadd.f32 0.0, %v371
        %v373 = vpop.f32.mrb[0].mxu0
        %v374 = vadd.f32 0.0, %v373
        %375 = vmatprep.mubr.f32.mxu0 0.0
        %376 = vmatmul.mubr.f32.gmra.mrb[0].mxu0 %v248
        %v377 = vpop.f32.mrb[0].mxu0
        %v378 = vadd.f32 0.0, %v377
        %v379 = vpop.f32.mrb[0].mxu0
        %v380 = vadd.f32 0.0, %v379
        %381 = vmatprep.mubr.f32.mxu0 0.0
        %382 = vmatmul.mubr.f32.gmra.mrb[0].mxu0 %v249
        %v383 = vpop.f32.mrb[0].mxu0
        %v384 = vadd.f32 0.0, %v383
        %v385 = vpop.f32.mrb[0].mxu0
        %v386 = vadd.f32 0.0, %v385
        %387 = vmatprep.mubr.f32.mxu0 0.0
        %388 = vmatmul.mubr.f32.gmra.mrb[0].mxu0 %v250
        %v389 = vpop.f32.mrb[0].mxu0
        %v390 = vadd.f32 0.0, %v389
        %v391 = vpop.f32.mrb[0].mxu0
        %v392 = vadd.f32 0.0, %v391
        %393 = vmatprep.mubr.f32.mxu0 0.0
        %394 = vmatmul.mubr.f32.gmra.mrb[0].mxu0 %v251
        %v395 = vpop.f32.mrb[0].mxu0
        %v396 = vadd.f32 0.0, %v395
        %v397 = vpop.f32.mrb[0].mxu0
        %v398 = vadd.f32 0.0, %v397
        %399 = vmatprep.mubr.f32.mxu0 0.0
        %400 = vmatmul.mubr.f32.gmra.mrb[0].mxu0 %v252
        %v401 = vpop.f32.mrb[0].mxu0
        %v402 = vadd.f32 0.0, %v401
        %v403 = vpop.f32.mrb[0].mxu0
        %v404 = vadd.f32 0.0, %v403
        %405 = vmatprep.mubr.f32.mxu0 0.0
        %406 = vmatmul.mubr.f32.gmra.mrb[0].mxu0 %v253
        %v407 = vpop.f32.mrb[0].mxu0
        %v408 = vadd.f32 0.0, %v407
        %v409 = vpop.f32.mrb[0].mxu0
        %v410 = vadd.f32 0.0, %v409
        %411 = vmatprep.mubr.f32.mxu0 0.0
        %412 = vmatmul.mubr.f32.gmra.mrb[0].mxu0 %v254
        %v413 = vpop.f32.mrb[0].mxu0
        %v414 = vadd.f32 0.0, %v413
        %v415 = vpop.f32.mrb[0].mxu0
        %v416 = vadd.f32 0.0, %v415
        %417 = vmatprep.mubr.f32.mxu0 0.0
        %418 = vmatmul.mubr.f32.gmra.mrb[0].mxu0 %v255
        %v419 = vpop.f32.mrb[0].mxu0
        %v420 = vadd.f32 0.0, %v419
        %v421 = vpop.f32.mrb[0].mxu0
        %v422 = vadd.f32 0.0, %v421
        %423 = vmatprep.mubr.f32.mxu0 0.0
        %424 = vmatmul.mubr.f32.gmra.mrb[0].mxu0 %v256
        %v425 = vpop.f32.mrb[0].mxu0
        %v426 = vadd.f32 0.0, %v425
        %v427 = vpop.f32.mrb[0].mxu0
        %v428 = vadd.f32 0.0, %v427
        %429 = vmatprep.mubr.f32.mxu0 0.0
        %430 = vmatmul.mubr.f32.gmra.mrb[0].mxu0 %v257
        %v431 = vpop.f32.mrb[0].mxu0
        %v432 = vadd.f32 0.0, %v431
        %v433 = vpop.f32.mrb[0].mxu0
        %v434 = vadd.f32 0.0, %v433
        %435 = vmatprep.mubr.f32.mxu0 0.0
        %436 = vmatmul.mubr.f32.gmra.mrb[0].mxu0 %v258
        %v437 = vpop.f32.mrb[0].mxu0
        %v438 = vadd.f32 0.0, %v437
        %v439 = vpop.f32.mrb[0].mxu0
        %v440 = vadd.f32 0.0, %v439
        %441 = vmatprep.mubr.f32.mxu0 0.0
        %442 = vmatmul.mubr.f32.gmra.mrb[0].mxu0 %v259
        %v443 = vpop.f32.mrb[0].mxu0
        %v444 = vadd.f32 0.0, %v443
        %v445 = vpop.f32.mrb[0].mxu0
        %v446 = vadd.f32 0.0, %v445
        %447 = vmatprep.mubr.f32.mxu0 0.0
        %448 = vmatmul.mubr.f32.gmra.mrb[0].mxu0 %v260
        %v449 = vpop.f32.mrb[0].mxu0
        %v450 = vadd.f32 0.0, %v449
        %v451 = vpop.f32.mrb[0].mxu0
        %v452 = vadd.f32 0.0, %v451
        %453 = vdwg.mxu0
        %v454 = vpack.c.bf16 %v366, %v360
        %v455 = vpack.c.bf16 %v378, %v372
        %v456 = vpack.c.bf16 %v390, %v384
        %v457 = vpack.c.bf16 %v402, %v396
        %v458 = vpack.c.bf16 %v414, %v408
        %v459 = vpack.c.bf16 %v426, %v420
        %v460 = vpack.c.bf16 %v438, %v432
        %v461 = vpack.c.bf16 %v450, %v444
        %v470 = vunpack.c.l.b16 %v454
        %v471 = vunpack.c.h.b16 %v454
        %v472 = vunpack.c.l.b16 %v455
        %v473 = vunpack.c.h.b16 %v455
        %v474 = vunpack.c.l.b16 %v456
        %v475 = vunpack.c.h.b16 %v456
        %v476 = vunpack.c.l.b16 %v457
        %v477 = vunpack.c.h.b16 %v457
        %v478 = vunpack.c.l.b16 %v458
        %v479 = vunpack.c.h.b16 %v458
        %v480 = vunpack.c.l.b16 %v459
        %v481 = vunpack.c.h.b16 %v459
        %v482 = vunpack.c.l.b16 %v460
        %v483 = vunpack.c.h.b16 %v460
        %v484 = vunpack.c.l.b16 %v461
        %v485 = vunpack.c.h.b16 %v461
        %v486 = vpack.c.b16 %v470, %v470
        %v487 = vpack.c.b16 %v471, %v471
        %v488 = vpack.c.b16 %v472, %v472
        %v489 = vpack.c.b16 %v473, %v473
        %v490 = vpack.c.b16 %v474, %v474
        %v491 = vpack.c.b16 %v475, %v475
        %v492 = vpack.c.b16 %v476, %v476
        %v493 = vpack.c.b16 %v477, %v477
        %v494 = vpack.c.b16 %v478, %v478
        %v495 = vpack.c.b16 %v479, %v479
        %v496 = vpack.c.b16 %v480, %v480
        %v497 = vpack.c.b16 %v481, %v481
        %v498 = vpack.c.b16 %v482, %v482
        %v499 = vpack.c.b16 %v483, %v483
        %v500 = vpack.c.b16 %v484, %v484
        %v501 = vpack.c.b16 %v485, %v485
        %518 = vst [vmem:[%s234] sm:$0xf] %v486
        %519 = vst [vmem:[%s234 + $0x4] sm:$0xf] %v487
        %520 = vst [vmem:[%s234 + $0x8] sm:$0xf] %v488
        %521 = vst [vmem:[%s234 + $0xc] sm:$0xf] %v489
        %522 = vst [vmem:[%s234 + $0x10] sm:$0xf] %v490
        %523 = vst [vmem:[%s234 + $0x14] sm:$0xf] %v491
        %524 = vst [vmem:[%s234 + $0x18] sm:$0xf] %v492
        %525 = vst [vmem:[%s234 + $0x1c] sm:$0xf] %v493
        %526 = vst [vmem:[%s234 + $0x20] sm:$0xf] %v494
        %527 = vst [vmem:[%s234 + $0x24] sm:$0xf] %v495
        %528 = vst [vmem:[%s234 + $0x28] sm:$0xf] %v496
        %529 = vst [vmem:[%s234 + $0x2c] sm:$0xf] %v497
        %530 = vst [vmem:[%s234 + $0x30] sm:$0xf] %v498
        %531 = vst [vmem:[%s234 + $0x34] sm:$0xf] %v499
        %532 = vst [vmem:[%s234 + $0x38] sm:$0xf] %v500
        %533 = vst [vmem:[%s234 + $0x3c] sm:$0xf] %v501
        %v534 = vld [vmem:[%s2] sm:$0x1]
        %v536 = vlaneseq
        %v537 = vshrl.u32 %v536, 7
        %v538 = vsub.s32 0, %v537
        %v539 = vrot.slane %v534, %v538
        %v541 = vadd.f32 %v362, %v539
        %v542 = vadd.f32 %v368, %v539
        %v543 = vadd.f32 %v374, %v539
        %v544 = vadd.f32 %v380, %v539
        %v545 = vadd.f32 %v386, %v539
        %v546 = vadd.f32 %v392, %v539
        %v547 = vadd.f32 %v398, %v539
        %v548 = vadd.f32 %v404, %v539
        %v549 = vadd.f32 %v410, %v539
        %v550 = vadd.f32 %v416, %v539
        %v551 = vadd.f32 %v422, %v539
        %v552 = vadd.f32 %v428, %v539
        %v553 = vadd.f32 %v434, %v539
        %v554 = vadd.f32 %v440, %v539
        %v555 = vadd.f32 %v446, %v539
        %v556 = vadd.f32 %v452, %v539
        %557 = vst [vmem:[%s241] sm:$0xff] %v541
        %558 = vst [vmem:[%s241 + $0x8] sm:$0xff] %v542
        %559 = vst [vmem:[%s241 + $0x10] sm:$0xff] %v543
        %560 = vst [vmem:[%s241 + $0x18] sm:$0xff] %v544
        %561 = vst [vmem:[%s241 + $0x20] sm:$0xff] %v545
        %562 = vst [vmem:[%s241 + $0x28] sm:$0xff] %v546
        %563 = vst [vmem:[%s241 + $0x30] sm:$0xff] %v547
        %564 = vst [vmem:[%s241 + $0x38] sm:$0xff] %v548
        %565 = vst [vmem:[%s241 + $0x40] sm:$0xff] %v549
        %566 = vst [vmem:[%s241 + $0x48] sm:$0xff] %v550
        %567 = vst [vmem:[%s241 + $0x50] sm:$0xff] %v551
        %568 = vst [vmem:[%s241 + $0x58] sm:$0xff] %v552
        %569 = vst [vmem:[%s241 + $0x60] sm:$0xff] %v553
        %570 = vst [vmem:[%s241 + $0x68] sm:$0xff] %v554
        %571 = vst [vmem:[%s241 + $0x70] sm:$0xff] %v555
        %572 = vst [vmem:[%s241 + $0x78] sm:$0xff] %v556
        %s573 = sand.u32 %s102, 1
        %s574 = scalar_lea.sflag [#allocation4], %s573
        %s575 = sand.u32 %s102, 1
        %s576 = smul.addr %s575, 64
        %s577 = scalar_lea.vmem [#allocation7], %s576
        %s578 = sand.u32 %s128, 1
        %s579 = scalar_lea.sflag [#allocation9], %s578
        %s580 = sand.u32 %s128, 1
        %s581 = smul.addr %s580, 128
        %s582 = scalar_lea.vmem [#allocation8], %s581
        // Predicated region
        $region41: #{tpu_custom_call.1} parent=31 // pred_check
          %p583 = pneg %p112
        $region42: #{tpu_custom_call.1} parent=31 // pred_check_branch
          %585 = sbr.rel (%p583) target = $region44
        $region43: #{tpu_custom_call.1} parent=31 // pred_region
          %s586 = smul.u32 16, %s26
          %s588 = ssub.s32 1024, 1024
          %589 = vsyncadd %s574, %s588
          %s590 = smul.addr %s586, 64
          %s591 = scalar_lea.hbm %s3, %s590
          %s592 = sshll.u32 %s577, 4
          %s593 = int_to_ptr.vmem [resolvable:$true] %s592
          %598 = dma.vmem_to_hbm [thread:$0]  %s593, 1024, %s591, %s574, 64, 64, 4
        $region44: #{tpu_custom_call.1} parent=31 // pred_fallthru
          _
        // Predicated region
        $region45: #{tpu_custom_call.1} parent=31 // pred_check
          %p599 = pneg %p138
        $region46: #{tpu_custom_call.1} parent=31 // pred_check_branch
          %601 = sbr.rel (%p599) target = $region48
        $region47: #{tpu_custom_call.1} parent=31 // pred_region
          %s602 = smul.u32 16, %s26
          %s604 = ssub.s32 2048, 2048
          %605 = vsyncadd %s579, %s604
          %s606 = smul.addr %s602, 128
          %s607 = scalar_lea.hbm %s4, %s606
          %s608 = sshll.u32 %s582, 4
          %s609 = int_to_ptr.vmem [resolvable:$true] %s608
          %614 = dma.vmem_to_hbm [thread:$0]  %s609, 2048, %s607, %s579, 128, 128, 8
        $region48: #{tpu_custom_call.1} parent=31 // pred_fallthru
          _
      $region32: #{tpu_custom_call.1} parent=5 // pred_fallthru
        _
      %p615 = scmp.le.s32.totalorder 2, %s21
      // Predicated region
      $region49: #{tpu_custom_call.1} parent=5 // pred_check
        %p616 = pneg %p615
      $region50: #{tpu_custom_call.1} parent=5 // pred_check_branch
        %618 = sbr.rel (%p616) target = $region52
      $region51: #{tpu_custom_call.1} parent=5 // pred_region
        %s619 = ssub.s32 %s21, 2
        // Predicated region
        $region53: #{tpu_custom_call.1} parent=51 // pred_check
          %p620 = pneg %p118
        $region54: #{tpu_custom_call.1} parent=51 // pred_check_branch
          %622 = sbr.rel (%p620) target = $region56
        $region55: #{tpu_custom_call.1} parent=51 // pred_region
          %s623 = sand.u32 %s103, 1
          %s624 = scalar_lea.sflag [#allocation4], %s623
          %s625 = sand.u32 %s103, 1
          %s626 = smul.addr %s625, 64
          %s627 = scalar_lea.vmem [#allocation7], %s626
          %628 = dma.done %s624, 1024
        $region56: #{tpu_custom_call.1} parent=51 // pred_fallthru
          _
        // Predicated region
        $region57: #{tpu_custom_call.1} parent=51 // pred_check
          %p629 = pneg %p144
        $region58: #{tpu_custom_call.1} parent=51 // pred_check_branch
          %631 = sbr.rel (%p629) target = $region60
        $region59: #{tpu_custom_call.1} parent=51 // pred_region
          %s632 = sand.u32 %s129, 1
          %s633 = scalar_lea.sflag [#allocation9], %s632
          %s634 = sand.u32 %s129, 1
          %s635 = smul.addr %s634, 128
          %s636 = scalar_lea.vmem [#allocation8], %s635
          %637 = dma.done %s633, 2048
        $region60: #{tpu_custom_call.1} parent=51 // pred_fallthru
          _
      $region52: #{tpu_custom_call.1} parent=5 // pred_fallthru
        _
    $region6: #{tpu_custom_call.1} parent=1 // loop_footer
      %s25 = sadd.s32 1, %s21
    $region7: #{tpu_custom_call.1} parent=1 // loop_footer_branch
      %20 = sbr.rel target = $region3
    $region8: #{tpu_custom_call.1} parent=1 // loop_exit
      _
    %638 = vsyncpa [#allocation3], 1
    %s639 = scalar_lea.sflag [#allocation3], 1
    %640 = vsyncpa %s639, 1
    %641 = vsyncpa [#allocation6], 1
    %642 = vsyncpa [#allocation4], 1
    %s643 = scalar_lea.sflag [#allocation4], 1
    %644 = vsyncpa %s643, 1
    %645 = vsyncpa [#allocation9], 1
    %s646 = scalar_lea.sflag [#allocation9], 1
    %647 = vsyncpa %s646, 1

</llo_original>
